<compile_context>
chip_gen: v7x
topology: tpu7x:2x2x1
jax: 0.10.0
libtpu: 0.0.40
codegen_flags: <defaults>
</compile_context>

<pallas_src>
import functools

import jax
import jax.numpy as jnp
from jax.experimental import pallas as pl
from jax.experimental.pallas import tpu as pltpu


def _rmsnorm_kernel(x_ref, w_ref, o_ref, *, eps):
    # Compute in float32 like PyTorch's x.float().
    x = x_ref[...].astype(jnp.float32)
    ms = jnp.mean(x * x, axis=-1, keepdims=True)      # mean of squares over dim
    inv = jax.lax.rsqrt(ms + eps)                      # EUP rsqrt
    normed = (x * inv).astype(o_ref.dtype)             # matches .type_as(x)
    # weight is already in o_ref.dtype (cast once in the wrapper), broadcast
    # over rows; single store, no extra cast.
    o_ref[...] = normed * w_ref[...]


def _sublane(dtype) -> int:
    # Sublane packing: 8 rows for 4-byte, 16 for 2-byte, 32 for 1-byte dtypes.
    itemsize = jnp.dtype(dtype).itemsize
    return max(8, 32 // max(itemsize, 1))


def _pick_row_tile(rows: int, dim: int, dtype) -> int:
    """Largest sublane-aligned row tile whose pipelined buffers fit a modest
    VMEM budget (safe on v5e/v6e/v7x with vmem_limit_bytes=32 MiB)."""
    itemsize = jnp.dtype(dtype).itemsize
    sub = _sublane(dtype)
    if rows <= sub:
        return rows  # tiny problem: one block covering the full rows axis

    # Budget ~8 MiB for the double-buffered in + out blocks plus f32 temps:
    #   per row ~ dim * (2 bufs * (in + out) * itemsize + 4 bytes f32 temp)
    budget_bytes = 8 * 1024 * 1024
    bytes_per_row = dim * (2 * 2 * itemsize + 4)
    tile = budget_bytes // max(bytes_per_row, 1)
    tile = max(sub, min(1024, tile))
    tile = (tile // sub) * sub                  # sublane-aligned -> unmasked stores
    if tile >= rows:
        return rows                             # whole array fits in one block
    return tile


def rmsnorm(x, weight, eps=1e-6, row_tile=None):
    """x: (..., dim) float array; weight: (dim,). Returns x.dtype."""
    orig_shape = x.shape
    dim = orig_shape[-1]
    rows = 1
    for s in orig_shape[:-1]:
        rows *= s

    out_dtype = x.dtype
    x2 = x.reshape(rows, dim)
    # Cast the weight once in the wrapper so the kernel does no extra casts
    # and the output stays in x.dtype (halves writeback bytes for bf16 x).
    w2 = weight.astype(out_dtype).reshape(1, dim)

    if row_tile is None:
        row_tile = _pick_row_tile(rows, dim, out_dtype)
    row_tile = max(1, min(row_tile, rows))

    grid = (pl.cdiv(rows, row_tile),)

    kernel = functools.partial(_rmsnorm_kernel, eps=eps)

    out = pl.pallas_call(
        kernel,
        out_shape=jax.ShapeDtypeStruct((rows, dim), out_dtype),
        grid_spec=pltpu.PrefetchScalarGridSpec(
            num_scalar_prefetch=0,
            grid=grid,
            in_specs=[
                pl.BlockSpec((row_tile, dim), lambda i: (i, 0)),
                # Constant index_map: the weight block stays resident and is
                # only DMA'd once.
                pl.BlockSpec((1, dim), lambda i: (0, 0)),
            ],
            out_specs=pl.BlockSpec((row_tile, dim), lambda i: (i, 0)),
        ),
        compiler_params=pltpu.CompilerParams(
            # Rows blocks are independent -> megacore sharding on v7x.
            dimension_semantics=("parallel",),
            # Explicit scoped-VMEM limit: >= v5e's 16 MiB default, and safely
            # within v7x's 64 MiB physical VMEM.
            vmem_limit_bytes=32 * 1024 * 1024,
        ),
    )(x2, w2)

    return out.reshape(orig_shape)


def rmsnorm_reference(x, weight, eps=1e-6):
    # Mirrors the kernel path (weight cast to x.dtype, output in x.dtype).
    xf = x.astype(jnp.float32)
    inv = jax.lax.rsqrt(jnp.mean(xf * xf, axis=-1, keepdims=True) + eps)
    normed = (xf * inv).astype(x.dtype)
    return normed * weight.astype(x.dtype)


if __name__ == "__main__":
    key = jax.random.PRNGKey(0)

    # --- Test 1: small shape implied by the module (batch=2, seq=8, hidden=32)
    batch, seq, hidden = 2, 8, 32
    k1, k2, k3 = jax.random.split(key, 3)
    x = jax.random.normal(k1, (batch, seq, hidden), dtype=jnp.float32)
    weight = jnp.ones((hidden,), dtype=jnp.float32)  # RMSNorm init: ones(dim)

    out = jax.block_until_ready(rmsnorm(x, weight, eps=1e-6))
    ref = rmsnorm_reference(x, weight, eps=1e-6)
    assert out.shape == x.shape and out.dtype == x.dtype
    assert jnp.allclose(out, ref, atol=1e-5, rtol=1e-5), "f32 small mismatch"

    # --- Test 2: larger rows so the tiled/pipelined multi-block path runs
    rows_big, dim_big = 2048, 512
    xb = jax.random.normal(k2, (rows_big, dim_big), dtype=jnp.float32)
    wb = 1.0 + 0.1 * jax.random.normal(k3, (dim_big,), dtype=jnp.float32)
    out_b = jax.block_until_ready(rmsnorm(xb, wb, eps=1e-6))
    ref_b = rmsnorm_reference(xb, wb, eps=1e-6)
    assert jnp.allclose(out_b, ref_b, atol=1e-5, rtol=1e-5), "f32 tiled mismatch"

    # --- Test 3: bf16 input exercises the x.dtype output / weight-cast path
    xh = xb.astype(jnp.bfloat16)
    out_h = jax.block_until_ready(rmsnorm(xh, wb, eps=1e-6))
    ref_h = rmsnorm_reference(xh, wb, eps=1e-6)
    assert out_h.dtype == jnp.bfloat16
    assert jnp.allclose(out_h.astype(jnp.float32), ref_h.astype(jnp.float32),
                        atol=3e-2, rtol=3e-2), "bf16 mismatch"

    print("KERNEL_OK")
</pallas_src>

<mosaic_0001>
module attributes {stable_mosaic.version = 11 : i64} {
  func.func @_rmsnorm_kernel(%arg0: i32, %arg1: memref<16x32xf32, #tpu.memory_space<vmem>>, %arg2: memref<1x32xf32, #tpu.memory_space<vmem>>, %arg3: memref<16x32xf32, #tpu.memory_space<vmem>>) attributes {dimension_semantics = [#tpu.dimension_semantics<parallel>], iteration_bounds = array<i64: 1>, scalar_prefetch = 0 : i64, scratch_operands = 0 : i64, tpu.core_type = #tpu.core_type<tc>, window_params = [{transform_indices = @transform_0, window_bounds = array<i64: 16, 32>}, {pipeline_mode = #tpu.pipeline_mode<synchronous>, transform_indices = @transform_1, window_bounds = array<i64: 1, 32>}, {transform_indices = @transform_2, window_bounds = array<i64: 16, 32>}]} {
    %c0 = arith.constant 0 : index
    %c0_0 = arith.constant 0 : index
    %0 = vector.load %arg1[%c0, %c0_0] : memref<16x32xf32, #tpu.memory_space<vmem>>, vector<16x32xf32>
    %1 = arith.mulf %0, %0 : vector<16x32xf32>
    %cst = arith.constant dense<0.000000e+00> : vector<16xf32>
    %2 = vector.multi_reduction <add>, %1, %cst [1] : vector<16x32xf32> to vector<16xf32>
    %3 = vector.shape_cast %2 : vector<16xf32> to vector<16x1xf32>
    %cst_1 = arith.constant 3.200000e+01 : f32
    %4 = vector.broadcast %cst_1 : f32 to vector<16x1xf32>
    %5 = arith.divf %3, %4 : vector<16x1xf32>
    %cst_2 = arith.constant 9.99999997E-7 : f32
    %6 = vector.broadcast %cst_2 : f32 to vector<16x1xf32>
    %7 = arith.addf %5, %6 : vector<16x1xf32>
    %8 = math.rsqrt %7 : vector<16x1xf32>
    %9 = vector.broadcast %8 : vector<16x1xf32> to vector<16x32xf32>
    %10 = arith.mulf %0, %9 : vector<16x32xf32>
    %c0_3 = arith.constant 0 : index
    %c0_4 = arith.constant 0 : index
    %11 = vector.load %arg2[%c0_3, %c0_4] : memref<1x32xf32, #tpu.memory_space<vmem>>, vector<1x32xf32>
    %12 = vector.broadcast %11 : vector<1x32xf32> to vector<16x32xf32>
    %13 = arith.mulf %10, %12 : vector<16x32xf32>
    %c0_5 = arith.constant 0 : index
    %c0_6 = arith.constant 0 : index
    %14 = vector.load %arg3[%c0_5, %c0_6] : memref<16x32xf32, #tpu.memory_space<vmem>>, vector<16x32xf32>
    tpu.vector_store %arg3[%c0_5, %c0_6], %13 {strides = array<i32>} : memref<16x32xf32, #tpu.memory_space<vmem>>, vector<16x32xf32>,
    return
  }
  func.func @transform_0(%arg0: i32) -> (i32, i32) {
    %c0_i32 = arith.constant 0 : i32
    %c0_i32_0 = arith.constant 0 : i32
    return %arg0, %c0_i32 : i32, i32
  }
  func.func @transform_1(%arg0: i32) -> (i32, i32) {
    %c0_i32 = arith.constant 0 : i32
    %c0_i32_0 = arith.constant 0 : i32
    %c0_i32_1 = arith.constant 0 : i32
    return %c0_i32, %c0_i32_0 : i32, i32
  }
  func.func @transform_2(%arg0: i32) -> (i32, i32) {
    %c0_i32 = arith.constant 0 : i32
    %c0_i32_0 = arith.constant 0 : i32
    return %arg0, %c0_i32 : i32, i32
  }
}

</mosaic_0001>

<llo_original>
// kernel: tpu_custom_call.1
$region0: #{tpu_custom_call.1}
  #allocation0 [shape = 'u32[]', space=smem, size = 0x4, offset = 0x4, fixed_abs, tag = 'smem constant byte address 0x4 - core index']
  #allocation1 [shape = 'u32[144,128]{1,0:T(1,128)}', space=vmem, size = 0x12000, scoped, tag = 'internal scratch']
  %s0 = inlined_call_operand.hbm [shape: f32[16,32], index: 0, kind: input, shape index: {}]
  %s1 = inlined_call_operand.vmem [shape: f32[1,32], index: 1, kind: input, shape index: {}]
  %s2 = inlined_call_operand.hbm [shape: f32[16,32], index: 2, kind: output, shape index: {}]
  %s3 = sld [smem:[#allocation0]]
  $region22: #{tpu_custom_call.1} parent=0
    _
  %s5 = ssub.s32 1, %s3
  %s6 = scalar_select 0, %s5, %s3
  $region1: #{tpu_custom_call.1} parent=0
    #allocation2 [shape = 'u8[8192]{0}', space=vmem, size = 0x2000, scoped, tag = 'input window, operand 0, single buffered']
    #allocation3 [shape = 's32[1]{0}', space=sflag, size = 0x4, scoped, tag = 'scoped memory for tpu_custom_call.1']
    #allocation4 [shape = 's32[1]{0}', space=sflag, size = 0x4, scoped, tag = 'scoped memory for tpu_custom_call.1']
    #allocation5 [shape = 'u8[8192]{0}', space=vmem, size = 0x2000, scoped, tag = 'output window, operand 0, single buffered']
    %7 = vsyncpa [#allocation3], 0
    %8 = vsyncpa [#allocation4], 0
    // Predicated region
    $region2: #{tpu_custom_call.1} parent=1 // pred_check
      _
    $region3: #{tpu_custom_call.1} parent=1 // pred_check_branch
      %10 = sbr.rel (0) target = $region5
    $region4: #{tpu_custom_call.1} parent=1 // pred_region
      %s12 = ssub.s32 256, 256
      %13 = vsyncadd [#allocation3], %s12
      %s14 = sshll.u32 [#allocation2], 4
      %s15 = int_to_ptr.vmem [resolvable:$true] %s14
      %20 = dma.hbm_to_vmem [thread:$0]  %s0, 256, %s15, [#allocation3], 128, 128, 8
    $region5: #{tpu_custom_call.1} parent=1 // pred_fallthru
      _
    // Predicated region
    $region6: #{tpu_custom_call.1} parent=1 // pred_check
      _
    $region7: #{tpu_custom_call.1} parent=1 // pred_check_branch
      %22 = sbr.rel (0) target = $region9
    $region8: #{tpu_custom_call.1} parent=1 // pred_region
      _
    $region9: #{tpu_custom_call.1} parent=1 // pred_fallthru
      _
    // Predicated region
    $region10: #{tpu_custom_call.1} parent=1 // pred_check
      _
    $region11: #{tpu_custom_call.1} parent=1 // pred_check_branch
      %24 = sbr.rel (0) target = $region13
    $region12: #{tpu_custom_call.1} parent=1 // pred_region
      %25 = dma.done [#allocation3], 256
    $region13: #{tpu_custom_call.1} parent=1 // pred_fallthru
      _
    %v26 = vld [vmem:[#allocation2] sm:$0xff]
    %v27 = vld [vmem:[#allocation2 + $0x8] sm:$0xff]
    %v28 = vmul.f32 %v26, %v26
    %v29 = vmul.f32 %v27, %v27
    %vm30 = vcmask 261120
    %v31 = vsel %vm30, %v28, 0.0
    %32 = vadd.xlane.f32.xlu0 %v31
    %v33 = vpop.xlane.xlu0 %32
    %v34 = vsel %vm30, %v29, 0.0
    %35 = vadd.xlane.f32.xlu0 %v34
    %v36 = vpop.xlane.xlu0 %35
    %v37 = vrcp.pop 32.0
    %v38 = vmul.f32 %v33, %v37
    %v39 = vmul.f32 %v36, %v37
    %v40 = vadd.f32 %v38, 1e-06
    %v41 = vadd.f32 %v39, 1e-06
    %v42 = vrsqrt.pop %v40
    %v43 = vrsqrt.pop %v41
    %v44 = vmul.f32 %v26, %v42
    %v45 = vmul.f32 %v27, %v43
    %v46 = vld [vmem:[%s1] sm:$0x1]
    %v48 = vlaneseq
    %v49 = vshrl.u32 %v48, 7
    %v50 = vsub.s32 0, %v49
    %v51 = vrot.slane %v46, %v50
    %v53 = vmul.f32 %v44, %v51
    %v54 = vmul.f32 %v45, %v51
    %55 = vst.msk [vmem:[#allocation5] sm:$0xff] %vm30, %v53
    %56 = vst.msk [vmem:[#allocation5 + $0x8] sm:$0xff] %vm30, %v54
    // Predicated region
    $region14: #{tpu_custom_call.1} parent=1 // pred_check
      _
    $region15: #{tpu_custom_call.1} parent=1 // pred_check_branch
      %58 = sbr.rel (0) target = $region17
    $region16: #{tpu_custom_call.1} parent=1 // pred_region
      %s60 = ssub.s32 256, 256
      %61 = vsyncadd [#allocation4], %s60
      %s62 = sshll.u32 [#allocation5], 4
      %s63 = int_to_ptr.vmem [resolvable:$true] %s62
      %68 = dma.vmem_to_hbm [thread:$0]  %s63, 256, %s2, [#allocation4], 128, 128, 8
    $region17: #{tpu_custom_call.1} parent=1 // pred_fallthru
      _
    // Predicated region
    $region18: #{tpu_custom_call.1} parent=1 // pred_check
      _
    $region19: #{tpu_custom_call.1} parent=1 // pred_check_branch
      %70 = sbr.rel (0) target = $region21
    $region20: #{tpu_custom_call.1} parent=1 // pred_region
      %71 = dma.done [#allocation4], 256
    $region21: #{tpu_custom_call.1} parent=1 // pred_fallthru
      _
    %72 = vsyncpa [#allocation3], 1
    %73 = vsyncpa [#allocation4], 1

</llo_original>
